<compile_context>
chip_gen: v7x
topology: tpu7x:2x2x1
jax: 0.10.0
libtpu: 0.0.40
codegen_flags: <defaults>
</compile_context>

<pallas_src>
import math

import jax
import jax.numpy as jnp
from jax import lax
from jax.experimental import pallas as pl
from jax.experimental.pallas import tpu as pltpu

_LANE = 128                      # lane width (last dim), multiple of 128
_SUB = 8                         # sublane granularity (second-to-last dim)
_TARGET_BLOCK_BYTES = 4 << 20    # ~4 MiB per pipelined block (f32)
_MAX_TT = 64                     # cap on timesteps per block (bounds unroll size)


def _cdiv(a, b):
    return -(-a // b)


def _neuron_kernel(params_ref, x_ref, out_ref, vd_ref, vs_ref):
    # params_ref (SMEM, f32[6]): [vth, a1, b1, a2, b2, 0.5*vth]  (pre-transformed)
    tb = pl.program_id(1)
    tt = x_ref.shape[0]          # timesteps handled by this block (static)

    vth = params_ref[0]
    a1 = params_ref[1]
    b1 = params_ref[2]
    a2 = params_ref[3]
    b2 = params_ref[4]
    vs0 = params_ref[5]

    # First time-block of each feature tile: v_d = 0, v_s = 0.5 * v_threshold.
    @pl.when(tb == 0)
    def _():
        vd_ref[...] = jnp.zeros_like(vd_ref)
        vs_ref[...] = jnp.full(vs_ref.shape, vs0, dtype=vs_ref.dtype)

    def step(i, carry):
        vd, vs = carry
        vd = a1 * vd + b1 * vs + x_ref[i]
        vs = a2 * vs + b2 * vd
        # SurrogateFunction forward: spike = (v_s - vth >= 0) * vth ; soft reset.
        spike = jnp.where(vs >= vth, vth, 0.0)
        out_ref[i] = spike
        return vd, vs - spike

    vd, vs = lax.fori_loop(0, tt, step, (vd_ref[...], vs_ref[...]), unroll=True)

    # Final state is never consumed -> skip the writeback on the last time block.
    @pl.when(tb != pl.num_programs(1) - 1)
    def _():
        vd_ref[...] = vd
        vs_ref[...] = vs


def online_neuron(x, alpha_1, beta_1, alpha_2, beta_2, v_threshold=1.0):
    """x: f32[T, B, ...] (time-major) -> f32 spikes of the same shape."""
    T = x.shape[0]
    N = math.prod(x.shape[1:])

    x2 = x.reshape(T, N).astype(jnp.float32)

    # Lane-dense layout [T, R, 128]; pad only to the lane multiple (usually a no-op,
    # so the wrapper adds zero extra HBM traffic for typical shapes).
    R = _cdiv(N, _LANE)
    n_pad = R * _LANE
    if n_pad != N:
        # TODO(synk): rare ragged-N case still pays one pad/slice copy; could be
        # removed with an in-kernel masked store on the final row.
        x2 = jnp.pad(x2, ((0, 0), (0, n_pad - N)))
    x3 = x2.reshape(T, R, _LANE)

    # --- tiling -----------------------------------------------------------------
    target_elems = _TARGET_BLOCK_BYTES // 4
    if R <= _SUB:
        tile_rows = R            # equals full array dim (allowed even when < 8)
        n_feat = 1
    else:
        per_step_elems = R * _LANE
        # >= 2 feature tiles whenever possible (feeds both v7x TensorCores) and
        # enough tiles that one timestep of a tile fits the target block size.
        n_feat = max(2, _cdiv(per_step_elems, target_elems))
        n_feat = min(n_feat, R // _SUB)
        tile_rows = _cdiv(_cdiv(R, n_feat), _SUB) * _SUB
        tile_rows = min(tile_rows, (R // _SUB) * _SUB)   # multiple of 8 and <= R
        n_feat = _cdiv(R, tile_rows)

    # Block over time when the per-timestep slab is small; keep TT a divisor of T
    # so there is never a ragged trailing time block.
    per_tile_step_elems = tile_rows * _LANE
    tt = max(1, min(T, _MAX_TT, target_elems // per_tile_step_elems))
    while T % tt:
        tt -= 1
    n_time = T // tt

    # --- scalars (pre-transformed once; no in-kernel sigmoid) --------------------
    def _s(v):
        return jnp.asarray(v, jnp.float32).reshape(())

    vth = _s(v_threshold)
    a1 = jax.nn.sigmoid(_s(alpha_1)) - 0.5
    b1 = jax.nn.sigmoid(_s(beta_1)) - 0.5
    a2 = jax.nn.sigmoid(_s(alpha_2)) + 0.5
    b2 = jax.nn.sigmoid(_s(beta_2)) + 0.5
    params = jnp.stack([vth, a1, b1, a2, b2, 0.5 * vth]).astype(jnp.float32)

    # --- VMEM budget (2x in + 2x out double-buffers + 2 state + headroom) --------
    block_bytes = tt * tile_rows * _LANE * 4
    state_bytes = tile_rows * _LANE * 4
    needed = 4 * block_bytes + 2 * state_bytes + (4 << 20)
    cap = 48 << 20
    try:  # per-generation cap: v7x has only 64 MiB physical VMEM per TC
        cap = int(pltpu.get_tpu_info().vmem_capacity_bytes * 3 // 4)
    except Exception:
        pass
    vmem_limit = int(min(max(needed, 16 << 20), max(cap, 16 << 20)))

    out = pl.pallas_call(
        _neuron_kernel,
        out_shape=jax.ShapeDtypeStruct((T, R, _LANE), jnp.float32),
        grid_spec=pltpu.PrefetchScalarGridSpec(
            num_scalar_prefetch=0,
            grid=(n_feat, n_time),            # feature tiles outer, time (recurrence) inner
            in_specs=[
                pl.BlockSpec(memory_space=pltpu.MemorySpace.SMEM),       # params
                pl.BlockSpec((tt, tile_rows, _LANE), lambda f, t: (t, f, 0)),
            ],
            out_specs=pl.BlockSpec((tt, tile_rows, _LANE), lambda f, t: (t, f, 0)),
            scratch_shapes=[
                pltpu.VMEM((tile_rows, _LANE), jnp.float32),  # v_d (carried over time)
                pltpu.VMEM((tile_rows, _LANE), jnp.float32),  # v_s (carried over time)
            ],
        ),
        compiler_params=pltpu.CompilerParams(
            dimension_semantics=("parallel", "arbitrary"),
            vmem_limit_bytes=vmem_limit,
        ),
    )(params, x3)

    out = out.reshape(T, n_pad)
    if n_pad != N:
        out = out[:, :N]
    return out.reshape(x.shape)


def _reference(x, alpha_1, beta_1, alpha_2, beta_2, v_threshold=1.0):
    # Pure-JAX transcription of the PyTorch temporal loop (forward only).
    a1 = jax.nn.sigmoid(alpha_1) - 0.5
    b1 = jax.nn.sigmoid(beta_1) - 0.5
    a2 = jax.nn.sigmoid(alpha_2) + 0.5
    b2 = jax.nn.sigmoid(beta_2) + 0.5
    vd = jnp.zeros_like(x[0])
    vs = jnp.full_like(x[0], 0.5) * v_threshold
    outs = []
    for t in range(x.shape[0]):
        vd = a1 * vd + b1 * vs + x[t]
        vs = a2 * vs + b2 * vd
        out = (vs - v_threshold >= 0).astype(jnp.float32) * v_threshold
        vs = vs - out
        outs.append(out)
    return jnp.stack(outs, axis=0)


if __name__ == "__main__":
    T, B, C, H, W = 8, 2, 4, 16, 16
    key = jax.random.PRNGKey(0)
    x = jax.random.normal(key, (T, B, C, H, W), dtype=jnp.float32)

    # Deterministic parameter init, matching the module's __init__ defaults.
    alpha_1 = jnp.float32(0.0)
    beta_1 = jnp.float32(0.0)
    alpha_2 = jnp.float32(0.0)
    beta_2 = jnp.float32(0.0)
    v_threshold = 1.0

    out = online_neuron(x, alpha_1, beta_1, alpha_2, beta_2, v_threshold)
    out = jax.block_until_ready(out)

    ref = _reference(x, alpha_1, beta_1, alpha_2, beta_2, v_threshold)
    assert out.shape == x.shape
    assert jnp.allclose(out, ref, atol=1e-5, rtol=1e-5)

    # TODO(synk): SurrogateFunction's custom backward (triangular surrogate grad) and
    # the stateful detach/time_slice bookkeeping are training-time autograd concerns;
    # only the forward pass is implemented here.
    print("KERNEL_OK")
</pallas_src>

<mosaic_0001>
module attributes {stable_mosaic.version = 11 : i64} {
  func.func @_neuron_kernel(%arg0: i32, %arg1: i32, %arg2: memref<6xf32, #tpu.memory_space<smem>>, %arg3: memref<8x8x128xf32, #tpu.memory_space<vmem>>, %arg4: memref<8x8x128xf32, #tpu.memory_space<vmem>>, %arg5: memref<8x128xf32, #tpu.memory_space<vmem>>, %arg6: memref<8x128xf32, #tpu.memory_space<vmem>>) attributes {dimension_semantics = [#tpu.dimension_semantics<parallel>, #tpu.dimension_semantics<arbitrary>], iteration_bounds = array<i64: 2, 1>, scalar_prefetch = 0 : i64, scratch_operands = 2 : i64, tpu.core_type = #tpu.core_type<tc>, window_params = [{transform_indices = @transform_0, window_bounds = array<i64: 6>}, {transform_indices = @transform_1, window_bounds = array<i64: 8, 8, 128>}, {transform_indices = @transform_2, window_bounds = array<i64: 8, 8, 128>}]} {
    %c0 = arith.constant 0 : index
    %0 = memref.load %arg2[%c0] : memref<6xf32, #tpu.memory_space<smem>>
    %c1 = arith.constant 1 : index
    %1 = memref.load %arg2[%c1] : memref<6xf32, #tpu.memory_space<smem>>
    %c2 = arith.constant 2 : index
    %2 = memref.load %arg2[%c2] : memref<6xf32, #tpu.memory_space<smem>>
    %c3 = arith.constant 3 : index
    %3 = memref.load %arg2[%c3] : memref<6xf32, #tpu.memory_space<smem>>
    %c4 = arith.constant 4 : index
    %4 = memref.load %arg2[%c4] : memref<6xf32, #tpu.memory_space<smem>>
    %c5 = arith.constant 5 : index
    %5 = memref.load %arg2[%c5] : memref<6xf32, #tpu.memory_space<smem>>
    %c0_i32 = arith.constant 0 : i32
    %6 = arith.cmpi eq, %arg1, %c0_i32 : i32
    %7 = arith.extui %6 : i1 to i32
    %c0_i32_0 = arith.constant 0 : i32
    %8 = arith.cmpi ne, %7, %c0_i32_0 : i32
    scf.if %8 {
      %cst_47 = arith.constant 0.000000e+00 : f32
      %206 = vector.broadcast %cst_47 : f32 to vector<8x128xf32>
      %c0_48 = arith.constant 0 : index
      %c0_49 = arith.constant 0 : index
      %207 = vector.load %arg5[%c0_48, %c0_49] : memref<8x128xf32, #tpu.memory_space<vmem>>, vector<8x128xf32>
      tpu.vector_store %arg5[%c0_48, %c0_49], %206 {strides = array<i32>} : memref<8x128xf32, #tpu.memory_space<vmem>>, vector<8x128xf32>,
      %208 = vector.broadcast %5 : f32 to vector<8x128xf32>
      %c0_50 = arith.constant 0 : index
      %c0_51 = arith.constant 0 : index
      %209 = vector.load %arg6[%c0_50, %c0_51] : memref<8x128xf32, #tpu.memory_space<vmem>>, vector<8x128xf32>
      tpu.vector_store %arg6[%c0_50, %c0_51], %208 {strides = array<i32>} : memref<8x128xf32, #tpu.memory_space<vmem>>, vector<8x128xf32>,
    } else {
    }
    %c0_1 = arith.constant 0 : index
    %c0_2 = arith.constant 0 : index
    %9 = vector.load %arg5[%c0_1, %c0_2] : memref<8x128xf32, #tpu.memory_space<vmem>>, vector<8x128xf32>
    %c0_3 = arith.constant 0 : index
    %c0_4 = arith.constant 0 : index
    %10 = vector.load %arg6[%c0_3, %c0_4] : memref<8x128xf32, #tpu.memory_space<vmem>>, vector<8x128xf32>
    %c0_i32_5 = arith.constant 0 : i32
    %11 = vector.broadcast %1 : f32 to vector<8x128xf32>
    %12 = arith.mulf %11, %9 : vector<8x128xf32>
    %13 = vector.broadcast %2 : f32 to vector<8x128xf32>
    %14 = arith.mulf %13, %10 : vector<8x128xf32>
    %15 = arith.addf %12, %14 : vector<8x128xf32>
    %16 = arith.index_cast %c0_i32_5 : i32 to index
    %c0_6 = arith.constant 0 : index
    %c0_7 = arith.constant 0 : index
    %17 = vector.load %arg3[%16, %c0_6, %c0_7] : memref<8x8x128xf32, #tpu.memory_space<vmem>>, vector<1x8x128xf32>
    %18 = vector.shape_cast %17 : vector<1x8x128xf32> to vector<8x128xf32>
    %19 = arith.addf %15, %18 : vector<8x128xf32>
    %20 = vector.broadcast %3 : f32 to vector<8x128xf32>
    %21 = arith.mulf %20, %10 : vector<8x128xf32>
    %22 = vector.broadcast %4 : f32 to vector<8x128xf32>
    %23 = arith.mulf %22, %19 : vector<8x128xf32>
    %24 = arith.addf %21, %23 : vector<8x128xf32>
    %25 = vector.broadcast %0 : f32 to vector<8x128xf32>
    %26 = arith.cmpf oge, %24, %25 : vector<8x128xf32>
    %cst = arith.constant 0.000000e+00 : f32
    %27 = vector.broadcast %0 : f32 to vector<8x128xf32>
    %28 = vector.broadcast %cst : f32 to vector<8x128xf32>
    %29 = arith.select %26, %27, %28 : vector<8x128xi1>, vector<8x128xf32>
    %30 = arith.index_cast %c0_i32_5 : i32 to index
    %c0_8 = arith.constant 0 : index
    %c0_9 = arith.constant 0 : index
    %31 = vector.load %arg4[%30, %c0_8, %c0_9] : memref<8x8x128xf32, #tpu.memory_space<vmem>>, vector<1x8x128xf32>
    %32 = vector.shape_cast %31 : vector<1x8x128xf32> to vector<8x128xf32>
    %33 = vector.shape_cast %29 : vector<8x128xf32> to vector<1x8x128xf32>
    tpu.vector_store %arg4[%30, %c0_8, %c0_9], %33 {strides = array<i32>} : memref<8x8x128xf32, #tpu.memory_space<vmem>>, vector<1x8x128xf32>,
    %34 = arith.subf %24, %29 : vector<8x128xf32>
    %c1_i32 = arith.constant 1 : i32
    %35 = vector.broadcast %1 : f32 to vector<8x128xf32>
    %36 = arith.mulf %35, %19 : vector<8x128xf32>
    %37 = vector.broadcast %2 : f32 to vector<8x128xf32>
    %38 = arith.mulf %37, %34 : vector<8x128xf32>
    %39 = arith.addf %36, %38 : vector<8x128xf32>
    %40 = arith.index_cast %c1_i32 : i32 to index
    %c0_10 = arith.constant 0 : index
    %c0_11 = arith.constant 0 : index
    %41 = vector.load %arg3[%40, %c0_10, %c0_11] : memref<8x8x128xf32, #tpu.memory_space<vmem>>, vector<1x8x128xf32>
    %42 = vector.shape_cast %41 : vector<1x8x128xf32> to vector<8x128xf32>
    %43 = arith.addf %39, %42 : vector<8x128xf32>
    %44 = vector.broadcast %3 : f32 to vector<8x128xf32>
    %45 = arith.mulf %44, %34 : vector<8x128xf32>
    %46 = vector.broadcast %4 : f32 to vector<8x128xf32>
    %47 = arith.mulf %46, %43 : vector<8x128xf32>
    %48 = arith.addf %45, %47 : vector<8x128xf32>
    %49 = vector.broadcast %0 : f32 to vector<8x128xf32>
    %50 = arith.cmpf oge, %48, %49 : vector<8x128xf32>
    %cst_12 = arith.constant 0.000000e+00 : f32
    %51 = vector.broadcast %0 : f32 to vector<8x128xf32>
    %52 = vector.broadcast %cst_12 : f32 to vector<8x128xf32>
    %53 = arith.select %50, %51, %52 : vector<8x128xi1>, vector<8x128xf32>
    %54 = arith.index_cast %c1_i32 : i32 to index
    %c0_13 = arith.constant 0 : index
    %c0_14 = arith.constant 0 : index
    %55 = vector.load %arg4[%54, %c0_13, %c0_14] : memref<8x8x128xf32, #tpu.memory_space<vmem>>, vector<1x8x128xf32>
    %56 = vector.shape_cast %55 : vector<1x8x128xf32> to vector<8x128xf32>
    %57 = vector.shape_cast %53 : vector<8x128xf32> to vector<1x8x128xf32>
    tpu.vector_store %arg4[%54, %c0_13, %c0_14], %57 {strides = array<i32>} : memref<8x8x128xf32, #tpu.memory_space<vmem>>, vector<1x8x128xf32>,
    %58 = arith.subf %48, %53 : vector<8x128xf32>
    %c2_i32 = arith.constant 2 : i32
    %59 = vector.broadcast %1 : f32 to vector<8x128xf32>
    %60 = arith.mulf %59, %43 : vector<8x128xf32>
    %61 = vector.broadcast %2 : f32 to vector<8x128xf32>
    %62 = arith.mulf %61, %58 : vector<8x128xf32>
    %63 = arith.addf %60, %62 : vector<8x128xf32>
    %64 = arith.index_cast %c2_i32 : i32 to index
    %c0_15 = arith.constant 0 : index
    %c0_16 = arith.constant 0 : index
    %65 = vector.load %arg3[%64, %c0_15, %c0_16] : memref<8x8x128xf32, #tpu.memory_space<vmem>>, vector<1x8x128xf32>
    %66 = vector.shape_cast %65 : vector<1x8x128xf32> to vector<8x128xf32>
    %67 = arith.addf %63, %66 : vector<8x128xf32>
    %68 = vector.broadcast %3 : f32 to vector<8x128xf32>
    %69 = arith.mulf %68, %58 : vector<8x128xf32>
    %70 = vector.broadcast %4 : f32 to vector<8x128xf32>
    %71 = arith.mulf %70, %67 : vector<8x128xf32>
    %72 = arith.addf %69, %71 : vector<8x128xf32>
    %73 = vector.broadcast %0 : f32 to vector<8x128xf32>
    %74 = arith.cmpf oge, %72, %73 : vector<8x128xf32>
    %cst_17 = arith.constant 0.000000e+00 : f32
    %75 = vector.broadcast %0 : f32 to vector<8x128xf32>
    %76 = vector.broadcast %cst_17 : f32 to vector<8x128xf32>
    %77 = arith.select %74, %75, %76 : vector<8x128xi1>, vector<8x128xf32>
    %78 = arith.index_cast %c2_i32 : i32 to index
    %c0_18 = arith.constant 0 : index
    %c0_19 = arith.constant 0 : index
    %79 = vector.load %arg4[%78, %c0_18, %c0_19] : memref<8x8x128xf32, #tpu.memory_space<vmem>>, vector<1x8x128xf32>
    %80 = vector.shape_cast %79 : vector<1x8x128xf32> to vector<8x128xf32>
    %81 = vector.shape_cast %77 : vector<8x128xf32> to vector<1x8x128xf32>
    tpu.vector_store %arg4[%78, %c0_18, %c0_19], %81 {strides = array<i32>} : memref<8x8x128xf32, #tpu.memory_space<vmem>>, vector<1x8x128xf32>,
    %82 = arith.subf %72, %77 : vector<8x128xf32>
    %c3_i32 = arith.constant 3 : i32
    %83 = vector.broadcast %1 : f32 to vector<8x128xf32>
    %84 = arith.mulf %83, %67 : vector<8x128xf32>
    %85 = vector.broadcast %2 : f32 to vector<8x128xf32>
    %86 = arith.mulf %85, %82 : vector<8x128xf32>
    %87 = arith.addf %84, %86 : vector<8x128xf32>
    %88 = arith.index_cast %c3_i32 : i32 to index
    %c0_20 = arith.constant 0 : index
    %c0_21 = arith.constant 0 : index
    %89 = vector.load %arg3[%88, %c0_20, %c0_21] : memref<8x8x128xf32, #tpu.memory_space<vmem>>, vector<1x8x128xf32>
    %90 = vector.shape_cast %89 : vector<1x8x128xf32> to vector<8x128xf32>
    %91 = arith.addf %87, %90 : vector<8x128xf32>
    %92 = vector.broadcast %3 : f32 to vector<8x128xf32>
    %93 = arith.mulf %92, %82 : vector<8x128xf32>
    %94 = vector.broadcast %4 : f32 to vector<8x128xf32>
    %95 = arith.mulf %94, %91 : vector<8x128xf32>
    %96 = arith.addf %93, %95 : vector<8x128xf32>
    %97 = vector.broadcast %0 : f32 to vector<8x128xf32>
    %98 = arith.cmpf oge, %96, %97 : vector<8x128xf32>
    %cst_22 = arith.constant 0.000000e+00 : f32
    %99 = vector.broadcast %0 : f32 to vector<8x128xf32>
    %100 = vector.broadcast %cst_22 : f32 to vector<8x128xf32>
    %101 = arith.select %98, %99, %100 : vector<8x128xi1>, vector<8x128xf32>
    %102 = arith.index_cast %c3_i32 : i32 to index
    %c0_23 = arith.constant 0 : index
    %c0_24 = arith.constant 0 : index
    %103 = vector.load %arg4[%102, %c0_23, %c0_24] : memref<8x8x128xf32, #tpu.memory_space<vmem>>, vector<1x8x128xf32>
    %104 = vector.shape_cast %103 : vector<1x8x128xf32> to vector<8x128xf32>
    %105 = vector.shape_cast %101 : vector<8x128xf32> to vector<1x8x128xf32>
    tpu.vector_store %arg4[%102, %c0_23, %c0_24], %105 {strides = array<i32>} : memref<8x8x128xf32, #tpu.memory_space<vmem>>, vector<1x8x128xf32>,
    %106 = arith.subf %96, %101 : vector<8x128xf32>
    %c4_i32 = arith.constant 4 : i32
    %107 = vector.broadcast %1 : f32 to vector<8x128xf32>
    %108 = arith.mulf %107, %91 : vector<8x128xf32>
    %109 = vector.broadcast %2 : f32 to vector<8x128xf32>
    %110 = arith.mulf %109, %106 : vector<8x128xf32>
    %111 = arith.addf %108, %110 : vector<8x128xf32>
    %112 = arith.index_cast %c4_i32 : i32 to index
    %c0_25 = arith.constant 0 : index
    %c0_26 = arith.constant 0 : index
    %113 = vector.load %arg3[%112, %c0_25, %c0_26] : memref<8x8x128xf32, #tpu.memory_space<vmem>>, vector<1x8x128xf32>
    %114 = vector.shape_cast %113 : vector<1x8x128xf32> to vector<8x128xf32>
    %115 = arith.addf %111, %114 : vector<8x128xf32>
    %116 = vector.broadcast %3 : f32 to vector<8x128xf32>
    %117 = arith.mulf %116, %106 : vector<8x128xf32>
    %118 = vector.broadcast %4 : f32 to vector<8x128xf32>
    %119 = arith.mulf %118, %115 : vector<8x128xf32>
    %120 = arith.addf %117, %119 : vector<8x128xf32>
    %121 = vector.broadcast %0 : f32 to vector<8x128xf32>
    %122 = arith.cmpf oge, %120, %121 : vector<8x128xf32>
    %cst_27 = arith.constant 0.000000e+00 : f32
    %123 = vector.broadcast %0 : f32 to vector<8x128xf32>
    %124 = vector.broadcast %cst_27 : f32 to vector<8x128xf32>
    %125 = arith.select %122, %123, %124 : vector<8x128xi1>, vector<8x128xf32>
    %126 = arith.index_cast %c4_i32 : i32 to index
    %c0_28 = arith.constant 0 : index
    %c0_29 = arith.constant 0 : index
    %127 = vector.load %arg4[%126, %c0_28, %c0_29] : memref<8x8x128xf32, #tpu.memory_space<vmem>>, vector<1x8x128xf32>
    %128 = vector.shape_cast %127 : vector<1x8x128xf32> to vector<8x128xf32>
    %129 = vector.shape_cast %125 : vector<8x128xf32> to vector<1x8x128xf32>
    tpu.vector_store %arg4[%126, %c0_28, %c0_29], %129 {strides = array<i32>} : memref<8x8x128xf32, #tpu.memory_space<vmem>>, vector<1x8x128xf32>,
    %130 = arith.subf %120, %125 : vector<8x128xf32>
    %c5_i32 = arith.constant 5 : i32
    %131 = vector.broadcast %1 : f32 to vector<8x128xf32>
    %132 = arith.mulf %131, %115 : vector<8x128xf32>
    %133 = vector.broadcast %2 : f32 to vector<8x128xf32>
    %134 = arith.mulf %133, %130 : vector<8x128xf32>
    %135 = arith.addf %132, %134 : vector<8x128xf32>
    %136 = arith.index_cast %c5_i32 : i32 to index
    %c0_30 = arith.constant 0 : index
    %c0_31 = arith.constant 0 : index
    %137 = vector.load %arg3[%136, %c0_30, %c0_31] : memref<8x8x128xf32, #tpu.memory_space<vmem>>, vector<1x8x128xf32>
    %138 = vector.shape_cast %137 : vector<1x8x128xf32> to vector<8x128xf32>
    %139 = arith.addf %135, %138 : vector<8x128xf32>
    %140 = vector.broadcast %3 : f32 to vector<8x128xf32>
    %141 = arith.mulf %140, %130 : vector<8x128xf32>
    %142 = vector.broadcast %4 : f32 to vector<8x128xf32>
    %143 = arith.mulf %142, %139 : vector<8x128xf32>
    %144 = arith.addf %141, %143 : vector<8x128xf32>
    %145 = vector.broadcast %0 : f32 to vector<8x128xf32>
    %146 = arith.cmpf oge, %144, %145 : vector<8x128xf32>
    %cst_32 = arith.constant 0.000000e+00 : f32
    %147 = vector.broadcast %0 : f32 to vector<8x128xf32>
    %148 = vector.broadcast %cst_32 : f32 to vector<8x128xf32>
    %149 = arith.select %146, %147, %148 : vector<8x128xi1>, vector<8x128xf32>
    %150 = arith.index_cast %c5_i32 : i32 to index
    %c0_33 = arith.constant 0 : index
    %c0_34 = arith.constant 0 : index
    %151 = vector.load %arg4[%150, %c0_33, %c0_34] : memref<8x8x128xf32, #tpu.memory_space<vmem>>, vector<1x8x128xf32>
    %152 = vector.shape_cast %151 : vector<1x8x128xf32> to vector<8x128xf32>
    %153 = vector.shape_cast %149 : vector<8x128xf32> to vector<1x8x128xf32>
    tpu.vector_store %arg4[%150, %c0_33, %c0_34], %153 {strides = array<i32>} : memref<8x8x128xf32, #tpu.memory_space<vmem>>, vector<1x8x128xf32>,
    %154 = arith.subf %144, %149 : vector<8x128xf32>
    %c6_i32 = arith.constant 6 : i32
    %155 = vector.broadcast %1 : f32 to vector<8x128xf32>
    %156 = arith.mulf %155, %139 : vector<8x128xf32>
    %157 = vector.broadcast %2 : f32 to vector<8x128xf32>
    %158 = arith.mulf %157, %154 : vector<8x128xf32>
    %159 = arith.addf %156, %158 : vector<8x128xf32>
    %160 = arith.index_cast %c6_i32 : i32 to index
    %c0_35 = arith.constant 0 : index
    %c0_36 = arith.constant 0 : index
    %161 = vector.load %arg3[%160, %c0_35, %c0_36] : memref<8x8x128xf32, #tpu.memory_space<vmem>>, vector<1x8x128xf32>
    %162 = vector.shape_cast %161 : vector<1x8x128xf32> to vector<8x128xf32>
    %163 = arith.addf %159, %162 : vector<8x128xf32>
    %164 = vector.broadcast %3 : f32 to vector<8x128xf32>
    %165 = arith.mulf %164, %154 : vector<8x128xf32>
    %166 = vector.broadcast %4 : f32 to vector<8x128xf32>
    %167 = arith.mulf %166, %163 : vector<8x128xf32>
    %168 = arith.addf %165, %167 : vector<8x128xf32>
    %169 = vector.broadcast %0 : f32 to vector<8x128xf32>
    %170 = arith.cmpf oge, %168, %169 : vector<8x128xf32>
    %cst_37 = arith.constant 0.000000e+00 : f32
    %171 = vector.broadcast %0 : f32 to vector<8x128xf32>
    %172 = vector.broadcast %cst_37 : f32 to vector<8x128xf32>
    %173 = arith.select %170, %171, %172 : vector<8x128xi1>, vector<8x128xf32>
    %174 = arith.index_cast %c6_i32 : i32 to index
    %c0_38 = arith.constant 0 : index
    %c0_39 = arith.constant 0 : index
    %175 = vector.load %arg4[%174, %c0_38, %c0_39] : memref<8x8x128xf32, #tpu.memory_space<vmem>>, vector<1x8x128xf32>
    %176 = vector.shape_cast %175 : vector<1x8x128xf32> to vector<8x128xf32>
    %177 = vector.shape_cast %173 : vector<8x128xf32> to vector<1x8x128xf32>
    tpu.vector_store %arg4[%174, %c0_38, %c0_39], %177 {strides = array<i32>} : memref<8x8x128xf32, #tpu.memory_space<vmem>>, vector<1x8x128xf32>,
    %178 = arith.subf %168, %173 : vector<8x128xf32>
    %c7_i32 = arith.constant 7 : i32
    %179 = vector.broadcast %1 : f32 to vector<8x128xf32>
    %180 = arith.mulf %179, %163 : vector<8x128xf32>
    %181 = vector.broadcast %2 : f32 to vector<8x128xf32>
    %182 = arith.mulf %181, %178 : vector<8x128xf32>
    %183 = arith.addf %180, %182 : vector<8x128xf32>
    %184 = arith.index_cast %c7_i32 : i32 to index
    %c0_40 = arith.constant 0 : index
    %c0_41 = arith.constant 0 : index
    %185 = vector.load %arg3[%184, %c0_40, %c0_41] : memref<8x8x128xf32, #tpu.memory_space<vmem>>, vector<1x8x128xf32>
    %186 = vector.shape_cast %185 : vector<1x8x128xf32> to vector<8x128xf32>
    %187 = arith.addf %183, %186 : vector<8x128xf32>
    %188 = vector.broadcast %3 : f32 to vector<8x128xf32>
    %189 = arith.mulf %188, %178 : vector<8x128xf32>
    %190 = vector.broadcast %4 : f32 to vector<8x128xf32>
    %191 = arith.mulf %190, %187 : vector<8x128xf32>
    %192 = arith.addf %189, %191 : vector<8x128xf32>
    %193 = vector.broadcast %0 : f32 to vector<8x128xf32>
    %194 = arith.cmpf oge, %192, %193 : vector<8x128xf32>
    %cst_42 = arith.constant 0.000000e+00 : f32
    %195 = vector.broadcast %0 : f32 to vector<8x128xf32>
    %196 = vector.broadcast %cst_42 : f32 to vector<8x128xf32>
    %197 = arith.select %194, %195, %196 : vector<8x128xi1>, vector<8x128xf32>
    %198 = arith.index_cast %c7_i32 : i32 to index
    %c0_43 = arith.constant 0 : index
    %c0_44 = arith.constant 0 : index
    %199 = vector.load %arg4[%198, %c0_43, %c0_44] : memref<8x8x128xf32, #tpu.memory_space<vmem>>, vector<1x8x128xf32>
    %200 = vector.shape_cast %199 : vector<1x8x128xf32> to vector<8x128xf32>
    %201 = vector.shape_cast %197 : vector<8x128xf32> to vector<1x8x128xf32>
    tpu.vector_store %arg4[%198, %c0_43, %c0_44], %201 {strides = array<i32>} : memref<8x8x128xf32, #tpu.memory_space<vmem>>, vector<1x8x128xf32>,
    %202 = arith.subf %192, %197 : vector<8x128xf32>
    %c8_i32 = arith.constant 8 : i32
    %c0_i32_45 = arith.constant 0 : i32
    %203 = arith.cmpi ne, %arg1, %c0_i32_45 : i32
    %204 = arith.extui %203 : i1 to i32
    %c0_i32_46 = arith.constant 0 : i32
    %205 = arith.cmpi ne, %204, %c0_i32_46 : i32
    scf.if %205 {
      %c0_47 = arith.constant 0 : index
      %c0_48 = arith.constant 0 : index
      %206 = vector.load %arg5[%c0_47, %c0_48] : memref<8x128xf32, #tpu.memory_space<vmem>>, vector<8x128xf32>
      tpu.vector_store %arg5[%c0_47, %c0_48], %187 {strides = array<i32>} : memref<8x128xf32, #tpu.memory_space<vmem>>, vector<8x128xf32>,
      %c0_49 = arith.constant 0 : index
      %c0_50 = arith.constant 0 : index
      %207 = vector.load %arg6[%c0_49, %c0_50] : memref<8x128xf32, #tpu.memory_space<vmem>>, vector<8x128xf32>
      tpu.vector_store %arg6[%c0_49, %c0_50], %202 {strides = array<i32>} : memref<8x128xf32, #tpu.memory_space<vmem>>, vector<8x128xf32>,
    } else {
    }
    return
  }
  func.func @transform_0(%arg0: i32, %arg1: i32) -> i32 {
    %c0_i32 = arith.constant 0 : i32
    %c0_i32_0 = arith.constant 0 : i32
    return %c0_i32 : i32
  }
  func.func @transform_1(%arg0: i32, %arg1: i32) -> (i32, i32, i32) {
    %c0_i32 = arith.constant 0 : i32
    %c0_i32_0 = arith.constant 0 : i32
    return %arg1, %arg0, %c0_i32 : i32, i32, i32
  }
  func.func @transform_2(%arg0: i32, %arg1: i32) -> (i32, i32, i32) {
    %c0_i32 = arith.constant 0 : i32
    %c0_i32_0 = arith.constant 0 : i32
    return %arg1, %arg0, %c0_i32 : i32, i32, i32
  }
}

</mosaic_0001>

<llo_original>
// kernel: tpu_custom_call.1
$region0: #{tpu_custom_call.1}
  #allocation0 [shape = 'u32[]', space=smem, size = 0x4, offset = 0x4, fixed_abs, tag = 'smem constant byte address 0x4 - core index']
  #allocation1 [shape = 'u32[144,128]{1,0:T(1,128)}', space=vmem, size = 0x12000, scoped, tag = 'internal scratch']
  #allocation2 [shape = 'f32[8,128]{1,0:T(8,128)}', space=vmem, size = 0x1000, scoped, tag = 'scratch operand']
  #allocation3 [shape = 'f32[8,128]{1,0:T(8,128)}', space=vmem, size = 0x1000, scoped, tag = 'scratch operand']
  %s0 = inlined_call_operand.hbm [shape: f32[6], index: 0, kind: input, shape index: {}]
  %s1 = inlined_call_operand.hbm [shape: f32[8,16,128], index: 1, kind: input, shape index: {}]
  %s2 = inlined_call_operand.hbm [shape: f32[8,16,128], index: 2, kind: output, shape index: {}]
  %s3 = sld [smem:[#allocation0]]
  $region57: #{tpu_custom_call.1} parent=0
    _
  %s5 = ssub.s32 1, %s3
  %s6 = scalar_select 0, %s5, %s3
  $region1: #{tpu_custom_call.1} parent=0
    #allocation4 [shape = 'u8[512]{0}', space=smem, size = 0x200, scoped, tag = 'input window, operand 0, single buffered']
    #allocation5 [shape = 's32[2]{0}', space=sflag, size = 0x8, scoped, tag = 'scoped memory for tpu_custom_call.1']
    #allocation6 [shape = 's32[2]{0}', space=sflag, size = 0x8, scoped, tag = 'scoped memory for tpu_custom_call.1']
    #allocation7 [shape = 's32[2]{0}', space=sflag, size = 0x8, scoped, tag = 'scoped memory for tpu_custom_call.1']
    #allocation8 [shape = 'u8[65536]{0}', space=vmem, size = 0x10000, scoped, tag = 'input window, operand 1']
    #allocation9 [shape = 'u8[65536]{0}', space=vmem, size = 0x10000, scoped, tag = 'output window, operand 0']
    %7 = vsyncpa [#allocation7], 0
    %8 = vsyncpa [#allocation5], 0
    %s9 = scalar_lea.sflag [#allocation5], 1
    %10 = vsyncpa %s9, 0
    %11 = vsyncpa [#allocation6], 0
    %s12 = scalar_lea.sflag [#allocation6], 1
    %13 = vsyncpa %s12, 0
    loop: start=0, step=1, limit=4
    $region2: #{tpu_custom_call.1} parent=1 // loop_pre_header
      _
    $region3: #{tpu_custom_call.1} parent=1 // loop_header
      %s15 = sphi 0, %s19
      %p16 = scmp.ge.s32.totalorder %s15, 4
      %s22 = sphi 0, %s34
      %s23 = sphi 0, %s30
      %s24 = sphi 0, %s22
      %s25 = sphi 0, %s23
      %s26 = sphi 0, %s24
      %s27 = sphi 0, %s25
      %s35 = sphi 0, %s35
      %s37 = sphi 0, %s35
      %s38 = sphi 0, %s37
      %s52 = sphi 0, %s38
      %s60 = sphi 0, %s62
      %s63 = sphi 0, %s60
      %s64 = sphi 0, %s63
      %s80 = sphi 0, %s64
      %s88 = sphi 0, %s90
      %s91 = sphi 0, %s88
      %s92 = sphi 0, %s91
      %s108 = sphi 0, %s92
    $region4: #{tpu_custom_call.1} parent=1 // loop_header_branch
      %18 = sbr.rel (%p16) target = $region8
    $region5: #{tpu_custom_call.1} parent=1 // loop_body
      %s20 = ssub.s32 %s15, 1
      %s21 = ssub.s32 %s15, 2
      %s28 = sadd.s32 1, %s23
      %p29 = scmp.ge.s32.totalorder %s28, 1
      %s30 = scalar_select %p29, 0, %s28
      %s31 = sadd.s32 1, %s22
      %s32 = scalar_select %p29, %s31, %s22
      %p33 = scmp.ge.s32.totalorder %s32, 2
      %s34 = scalar_select %p33, 0, %s32
      %s36 = sadd.s32 %s35, 1
      %p39 = scmp.eq.s32.totalorder %s15, 1
      %p40 = scmp.ne.s32.totalorder %s35, %s37
      %p41 = scmp.eq.s32.totalorder %s15, 0
      %p42 = por %p40, %p41
      %p43 = scmp.ne.s32.totalorder %s35, %s37
      %p44 = scmp.eq.s32.totalorder %s20, 1
      %p45 = por %p43, %p44
      %p46 = scmp.ne.s32.totalorder %s37, %s38
      %p47 = scmp.eq.s32.totalorder %s20, 0
      %p48 = por %p46, %p47
      %p49 = scmp.ne.s32.totalorder %s37, %s38
      %p50 = scmp.eq.s32.totalorder %s21, 1
      %p51 = por %p49, %p50
      %p53 = scmp.ne.s32.totalorder %s38, %s52
      %p54 = scmp.eq.s32.totalorder %s21, 0
      %p55 = por %p53, %p54
      %s56 = ssub.s32 %s23, %s30
      %s57 = ssub.s32 %s22, %s34
      %s58 = sor.u32 %s56, %s57
      %p59 = scmp.eq.s32.totalorder %s58, 0
      %s61 = sadd.s32 %s60, 1
      %s62 = scalar_select %p59, %s60, %s61
      %p65 = pneg %p59
      %p66 = scmp.eq.s32.totalorder %s15, 1
      %p67 = por %p65, %p66
      %p68 = scmp.ne.s32.totalorder %s60, %s63
      %p69 = scmp.eq.s32.totalorder %s15, 0
      %p70 = por %p68, %p69
      %p71 = scmp.ne.s32.totalorder %s60, %s63
      %p72 = scmp.eq.s32.totalorder %s20, 1
      %p73 = por %p71, %p72
      %p74 = scmp.ne.s32.totalorder %s63, %s64
      %p75 = scmp.eq.s32.totalorder %s20, 0
      %p76 = por %p74, %p75
      %p77 = scmp.ne.s32.totalorder %s63, %s64
      %p78 = scmp.eq.s32.totalorder %s21, 1
      %p79 = por %p77, %p78
      %p81 = scmp.ne.s32.totalorder %s64, %s80
      %p82 = scmp.eq.s32.totalorder %s21, 0
      %p83 = por %p81, %p82
      %s84 = ssub.s32 %s23, %s30
      %s85 = ssub.s32 %s22, %s34
      %s86 = sor.u32 %s84, %s85
      %p87 = scmp.eq.s32.totalorder %s86, 0
      %s89 = sadd.s32 %s88, 1
      %s90 = scalar_select %p87, %s88, %s89
      %p93 = pneg %p87
      %p94 = scmp.eq.s32.totalorder %s15, 1
      %p95 = por %p93, %p94
      %p96 = scmp.ne.s32.totalorder %s88, %s91
      %p97 = scmp.eq.s32.totalorder %s15, 0
      %p98 = por %p96, %p97
      %p99 = scmp.ne.s32.totalorder %s88, %s91
      %p100 = scmp.eq.s32.totalorder %s20, 1
      %p101 = por %p99, %p100
      %p102 = scmp.ne.s32.totalorder %s91, %s92
      %p103 = scmp.eq.s32.totalorder %s20, 0
      %p104 = por %p102, %p103
      %p105 = scmp.ne.s32.totalorder %s91, %s92
      %p106 = scmp.eq.s32.totalorder %s21, 1
      %p107 = por %p105, %p106
      %p109 = scmp.ne.s32.totalorder %s92, %s108
      %p110 = scmp.eq.s32.totalorder %s21, 0
      %p111 = por %p109, %p110
      %p112 = scmp.le.s32.totalorder 1, %s15
      %p113 = scmp.lt.s32.totalorder %s15, 3
      %p114 = pnand %p112, %p113
      %p115 = pneg %p114
      // Predicated region
      $region9: #{tpu_custom_call.1} parent=5 // pred_check
        _
      $region10: #{tpu_custom_call.1} parent=5 // pred_check_branch
        %117 = sbr.rel (%p114) target = $region12
      $region11: #{tpu_custom_call.1} parent=5 // pred_region
        %s118 = ssub.s32 %s15, 1
        // Predicated region
        $region13: #{tpu_custom_call.1} parent=11 // pred_check
          %p119 = pneg %p48
        $region14: #{tpu_custom_call.1} parent=11 // pred_check_branch
          %121 = sbr.rel (%p119) target = $region16
        $region15: #{tpu_custom_call.1} parent=11 // pred_region
          %s123 = ssub.s32 16, 16
          %124 = vsyncadd [#allocation7], %s123
          %127 = dma.hbm_to_smem %s0, 16, [#allocation4], [#allocation7]
        $region16: #{tpu_custom_call.1} parent=11 // pred_fallthru
          _
      $region12: #{tpu_custom_call.1} parent=5 // pred_fallthru
        _
      %p128 = scmp.lt.s32.totalorder %s15, 2
      // Predicated region
      $region17: #{tpu_custom_call.1} parent=5 // pred_check
        %p129 = pneg %p128
      $region18: #{tpu_custom_call.1} parent=5 // pred_check_branch
        %131 = sbr.rel (%p129) target = $region20
      $region19: #{tpu_custom_call.1} parent=5 // pred_region
        // Predicated region
        $region21: #{tpu_custom_call.1} parent=19 // pred_check
          %p132 = pneg %p70
        $region22: #{tpu_custom_call.1} parent=19 // pred_check_branch
          %134 = sbr.rel (%p132) target = $region24
        $region23: #{tpu_custom_call.1} parent=19 // pred_region
          %s135 = sand.u32 %s60, 1
          %s136 = scalar_lea.sflag [#allocation5], %s135
          %s137 = sand.u32 %s60, 1
          %s138 = smul.addr %s137, 64
          %s139 = scalar_lea.vmem [#allocation8], %s138
          %s140 = smul.u32 8, %s23
          %s142 = ssub.s32 1024, 1024
          %143 = vsyncadd %s136, %s142
          %s144 = smul.addr %s140, 2
          %s145 = sadd.s32 %s22, %s144
          %s146 = smul.addr %s145, 128
          %s147 = scalar_lea.hbm %s1, %s146
          %s148 = sshll.u32 %s139, 4
          %s149 = int_to_ptr.vmem [resolvable:$true] %s148
          %154 = dma.hbm_to_vmem [thread:$0]  %s147, 1024, %s149, %s136, 256, 128, 8
        $region24: #{tpu_custom_call.1} parent=19 // pred_fallthru
          _
      $region20: #{tpu_custom_call.1} parent=5 // pred_fallthru
        _
      %p155 = scmp.le.s32.totalorder 1, %s15
      %p156 = scmp.lt.s32.totalorder %s15, 3
      %p157 = pnand %p155, %p156
      %p158 = pneg %p157
      // Predicated region
      $region25: #{tpu_custom_call.1} parent=5 // pred_check
        _
      $region26: #{tpu_custom_call.1} parent=5 // pred_check_branch
        %160 = sbr.rel (%p157) target = $region28
      $region27: #{tpu_custom_call.1} parent=5 // pred_region
        %s161 = ssub.s32 %s15, 1
        // Predicated region
        $region29: #{tpu_custom_call.1} parent=27 // pred_check
          %p162 = pneg %p48
        $region30: #{tpu_custom_call.1} parent=27 // pred_check_branch
          %164 = sbr.rel (%p162) target = $region32
        $region31: #{tpu_custom_call.1} parent=27 // pred_region
          %165 = dma.done [#allocation7], 16
        $region32: #{tpu_custom_call.1} parent=27 // pred_fallthru
          _
        %s166 = sand.u32 %s63, 1
        %s167 = scalar_lea.sflag [#allocation5], %s166
        %s168 = sand.u32 %s63, 1
        %s169 = smul.addr %s168, 64
        %s170 = scalar_lea.vmem [#allocation8], %s169
        // Predicated region
        $region33: #{tpu_custom_call.1} parent=27 // pred_check
          %p171 = pneg %p76
        $region34: #{tpu_custom_call.1} parent=27 // pred_check_branch
          %173 = sbr.rel (%p171) target = $region36
        $region35: #{tpu_custom_call.1} parent=27 // pred_region
          %174 = dma.done %s167, 1024
        $region36: #{tpu_custom_call.1} parent=27 // pred_fallthru
          _
        %175 = sfence
        %p176 = pneg %p48
        %p177 = pneg %p45
        %s178 = sand.u32 %s63, 1
        %s179 = scalar_lea.sflag [#allocation5], %s178
        %s180 = sand.u32 %s63, 1
        %s181 = smul.addr %s180, 64
        %s182 = scalar_lea.vmem [#allocation8], %s181
        %p183 = pneg %p76
        %p184 = pneg %p73
        %p185 = pneg %p104
        %p186 = pneg %p101
        %s187 = sand.u32 %s91, 1
        %s188 = scalar_lea.sflag [#allocation6], %s187
        %s189 = sand.u32 %s91, 1
        %s190 = smul.addr %s189, 64
        %s191 = scalar_lea.vmem [#allocation9], %s190
        %s192 = smul.u32 8, %s25
        %s193 = smul.u32 8, %s25
        %s194 = sld [smem:[#allocation4]]
        %s195 = sld [smem:[#allocation4 + $0x1]]
        %s196 = sld [smem:[#allocation4 + $0x2]]
        %s197 = sld [smem:[#allocation4 + $0x3]]
        %s198 = sld [smem:[#allocation4 + $0x4]]
        %s199 = sld [smem:[#allocation4 + $0x5]]
        %p200 = scmp.eq.s32.totalorder %s25, 0
        // Predicated region
        $region37: #{tpu_custom_call.1} parent=27 // pred_check
          %p201 = pneg %p200
        $region38: #{tpu_custom_call.1} parent=27 // pred_check_branch
          %203 = sbr.rel (%p201) target = $region40
        $region39: #{tpu_custom_call.1} parent=27 // pred_region
          %204 = vst [vmem:[#allocation2] sm:$0xff] 0.0
          %v205 = vstv %s199
          %206 = vst [vmem:[#allocation3] sm:$0xff] %v205
        $region40: #{tpu_custom_call.1} parent=27 // pred_fallthru
          _
        %v207 = vld [vmem:[#allocation2] sm:$0xff]
        %v208 = vld [vmem:[#allocation3] sm:$0xff]
        %v209 = vstv %s195
        %v210 = vmul.f32 %v209, %v207
        %v211 = vstv %s196
        %v212 = vmul.f32 %v211, %v208
        %v213 = vadd.f32 %v210, %v212
        %v214 = vld [vmem:[%s170] sm:$0xff]
        %v215 = vadd.f32 %v213, %v214
        %v216 = vstv %s197
        %v217 = vmul.f32 %v216, %v208
        %v218 = vstv %s198
        %v219 = vmul.f32 %v218, %v215
        %v220 = vadd.f32 %v217, %v219
        %v221 = vstv %s194
        %vm222 = vcmp.ge.f32.partialorder %v220, %v221
        %v223 = vsel %vm222, %v221, 0.0
        %224 = vst [vmem:[%s191] sm:$0xff] %v223
        %v225 = vsub.f32 %v220, %v223
        %v226 = vmul.f32 %v209, %v215
        %v227 = vmul.f32 %v211, %v225
        %v228 = vadd.f32 %v226, %v227
        %s229 = scalar_lea.vmem %s170, 8 [#allocation8]
        %v230 = vld [vmem:[%s229] sm:$0xff]
        %v231 = vadd.f32 %v228, %v230
        %v232 = vmul.f32 %v216, %v225
        %v233 = vmul.f32 %v218, %v231
        %v234 = vadd.f32 %v232, %v233
        %vm235 = vcmp.ge.f32.partialorder %v234, %v221
        %v236 = vsel %vm235, %v221, 0.0
        %s237 = scalar_lea.vmem %s191, 8 [#allocation9]
        %238 = vst [vmem:[%s237] sm:$0xff] %v236
        %v239 = vsub.f32 %v234, %v236
        %v240 = vmul.f32 %v209, %v231
        %v241 = vmul.f32 %v211, %v239
        %v242 = vadd.f32 %v240, %v241
        %s243 = scalar_lea.vmem %s170, 16 [#allocation8]
        %v244 = vld [vmem:[%s243] sm:$0xff]
        %v245 = vadd.f32 %v242, %v244
        %v246 = vmul.f32 %v216, %v239
        %v247 = vmul.f32 %v218, %v245
        %v248 = vadd.f32 %v246, %v247
        %vm249 = vcmp.ge.f32.partialorder %v248, %v221
        %v250 = vsel %vm249, %v221, 0.0
        %s251 = scalar_lea.vmem %s191, 16 [#allocation9]
        %252 = vst [vmem:[%s251] sm:$0xff] %v250
        %v253 = vsub.f32 %v248, %v250
        %v254 = vmul.f32 %v209, %v245
        %v255 = vmul.f32 %v211, %v253
        %v256 = vadd.f32 %v254, %v255
        %s257 = scalar_lea.vmem %s170, 24 [#allocation8]
        %v258 = vld [vmem:[%s257] sm:$0xff]
        %v259 = vadd.f32 %v256, %v258
        %v260 = vmul.f32 %v216, %v253
        %v261 = vmul.f32 %v218, %v259
        %v262 = vadd.f32 %v260, %v261
        %vm263 = vcmp.ge.f32.partialorder %v262, %v221
        %v264 = vsel %vm263, %v221, 0.0
        %s265 = scalar_lea.vmem %s191, 24 [#allocation9]
        %266 = vst [vmem:[%s265] sm:$0xff] %v264
        %v267 = vsub.f32 %v262, %v264
        %v268 = vmul.f32 %v209, %v259
        %v269 = vmul.f32 %v211, %v267
        %v270 = vadd.f32 %v268, %v269
        %s271 = scalar_lea.vmem %s170, 32 [#allocation8]
        %v272 = vld [vmem:[%s271] sm:$0xff]
        %v273 = vadd.f32 %v270, %v272
        %v274 = vmul.f32 %v216, %v267
        %v275 = vmul.f32 %v218, %v273
        %v276 = vadd.f32 %v274, %v275
        %vm277 = vcmp.ge.f32.partialorder %v276, %v221
        %v278 = vsel %vm277, %v221, 0.0
        %s279 = scalar_lea.vmem %s191, 32 [#allocation9]
        %280 = vst [vmem:[%s279] sm:$0xff] %v278
        %v281 = vsub.f32 %v276, %v278
        %v282 = vmul.f32 %v209, %v273
        %v283 = vmul.f32 %v211, %v281
        %v284 = vadd.f32 %v282, %v283
        %s285 = scalar_lea.vmem %s170, 40 [#allocation8]
        %v286 = vld [vmem:[%s285] sm:$0xff]
        %v287 = vadd.f32 %v284, %v286
        %v288 = vmul.f32 %v216, %v281
        %v289 = vmul.f32 %v218, %v287
        %v290 = vadd.f32 %v288, %v289
        %vm291 = vcmp.ge.f32.partialorder %v290, %v221
        %v292 = vsel %vm291, %v221, 0.0
        %s293 = scalar_lea.vmem %s191, 40 [#allocation9]
        %294 = vst [vmem:[%s293] sm:$0xff] %v292
        %v295 = vsub.f32 %v290, %v292
        %v296 = vmul.f32 %v209, %v287
        %v297 = vmul.f32 %v211, %v295
        %v298 = vadd.f32 %v296, %v297
        %s299 = scalar_lea.vmem %s170, 48 [#allocation8]
        %v300 = vld [vmem:[%s299] sm:$0xff]
        %v301 = vadd.f32 %v298, %v300
        %v302 = vmul.f32 %v216, %v295
        %v303 = vmul.f32 %v218, %v301
        %v304 = vadd.f32 %v302, %v303
        %vm305 = vcmp.ge.f32.partialorder %v304, %v221
        %v306 = vsel %vm305, %v221, 0.0
        %s307 = scalar_lea.vmem %s191, 48 [#allocation9]
        %308 = vst [vmem:[%s307] sm:$0xff] %v306
        %v309 = vsub.f32 %v304, %v306
        %v310 = vmul.f32 %v209, %v301
        %v311 = vmul.f32 %v211, %v309
        %v312 = vadd.f32 %v310, %v311
        %s313 = scalar_lea.vmem %s170, 56 [#allocation8]
        %v314 = vld [vmem:[%s313] sm:$0xff]
        %v315 = vadd.f32 %v312, %v314
        %v316 = vmul.f32 %v216, %v309
        %v317 = vmul.f32 %v218, %v315
        %v318 = vadd.f32 %v316, %v317
        %vm319 = vcmp.ge.f32.partialorder %v318, %v221
        %v320 = vsel %vm319, %v221, 0.0
        %s321 = scalar_lea.vmem %s191, 56 [#allocation9]
        %322 = vst [vmem:[%s321] sm:$0xff] %v320
        %v323 = vsub.f32 %v318, %v320
        %p324 = scmp.ne.s32.totalorder %s25, 0
        // Predicated region
        $region41: #{tpu_custom_call.1} parent=27 // pred_check
          %p325 = pneg %p324
        $region42: #{tpu_custom_call.1} parent=27 // pred_check_branch
          %327 = sbr.rel (%p325) target = $region44
        $region43: #{tpu_custom_call.1} parent=27 // pred_region
          %328 = vst [vmem:[#allocation2] sm:$0xff] %v315
          %329 = vst [vmem:[#allocation3] sm:$0xff] %v323
        $region44: #{tpu_custom_call.1} parent=27 // pred_fallthru
          _
        %s330 = sand.u32 %s91, 1
        %s331 = scalar_lea.sflag [#allocation6], %s330
        %s332 = sand.u32 %s91, 1
        %s333 = smul.addr %s332, 64
        %s334 = scalar_lea.vmem [#allocation9], %s333
        // Predicated region
        $region45: #{tpu_custom_call.1} parent=27 // pred_check
          %p335 = pneg %p101
        $region46: #{tpu_custom_call.1} parent=27 // pred_check_branch
          %337 = sbr.rel (%p335) target = $region48
        $region47: #{tpu_custom_call.1} parent=27 // pred_region
          %s338 = smul.u32 8, %s25
          %s340 = ssub.s32 1024, 1024
          %341 = vsyncadd %s331, %s340
          %s342 = smul.addr %s338, 2
          %s343 = sadd.s32 %s24, %s342
          %s344 = smul.addr %s343, 128
          %s345 = scalar_lea.hbm %s2, %s344
          %s346 = sshll.u32 %s334, 4
          %s347 = int_to_ptr.vmem [resolvable:$true] %s346
          %352 = dma.vmem_to_hbm [thread:$0]  %s347, 1024, %s345, %s331, 128, 256, 8
        $region48: #{tpu_custom_call.1} parent=27 // pred_fallthru
          _
      $region28: #{tpu_custom_call.1} parent=5 // pred_fallthru
        _
      %p353 = scmp.le.s32.totalorder 2, %s15
      // Predicated region
      $region49: #{tpu_custom_call.1} parent=5 // pred_check
        %p354 = pneg %p353
      $region50: #{tpu_custom_call.1} parent=5 // pred_check_branch
        %356 = sbr.rel (%p354) target = $region52
      $region51: #{tpu_custom_call.1} parent=5 // pred_region
        %s357 = ssub.s32 %s15, 2
        // Predicated region
        $region53: #{tpu_custom_call.1} parent=51 // pred_check
          %p358 = pneg %p107
        $region54: #{tpu_custom_call.1} parent=51 // pred_check_branch
          %360 = sbr.rel (%p358) target = $region56
        $region55: #{tpu_custom_call.1} parent=51 // pred_region
          %s361 = sand.u32 %s92, 1
          %s362 = scalar_lea.sflag [#allocation6], %s361
          %s363 = sand.u32 %s92, 1
          %s364 = smul.addr %s363, 64
          %s365 = scalar_lea.vmem [#allocation9], %s364
          %366 = dma.done %s362, 1024
        $region56: #{tpu_custom_call.1} parent=51 // pred_fallthru
          _
      $region52: #{tpu_custom_call.1} parent=5 // pred_fallthru
        _
    $region6: #{tpu_custom_call.1} parent=1 // loop_footer
      %s19 = sadd.s32 1, %s15
    $region7: #{tpu_custom_call.1} parent=1 // loop_footer_branch
      %14 = sbr.rel target = $region3
    $region8: #{tpu_custom_call.1} parent=1 // loop_exit
      _
    %367 = vsyncpa [#allocation5], 1
    %s368 = scalar_lea.sflag [#allocation5], 1
    %369 = vsyncpa %s368, 1
    %370 = vsyncpa [#allocation6], 1
    %s371 = scalar_lea.sflag [#allocation6], 1
    %372 = vsyncpa %s371, 1
    %373 = vsyncpa [#allocation7], 1
    %s374 = scalar_lea.sflag [#allocation7], 1
    %375 = vsyncpa %s374, 1

</llo_original>
